<compile_context>
chip_gen: v5e
topology: v5e:2x2
jax: 0.10.0
libtpu: 0.0.40
codegen_flags: <defaults>
</compile_context>

<pallas_src>
import jax
import jax.numpy as jnp
from jax.experimental import pallas as pl
from jax.experimental.pallas import tpu as pltpu


_NEG_BIG = -1e30  # fills padded logit lanes so softmax ignores them (exp -> 0, no NaNs)


def _afs_kernel(x_ref, w1_ref, b1_ref, w2_ref, b2_ref, o_ref):
    x = x_ref[...]

    # fc1 + ReLU: (TB, Dp) @ (Dp, Hp) -> (TB, Hp); MXU, f32 accumulation.
    h = jnp.dot(x, w1_ref[...], preferred_element_type=jnp.float32) + b1_ref[...]
    h = jnp.maximum(h, 0.0).astype(w2_ref.dtype)

    # fc2: (TB, Hp) @ (Hp, Dp) -> (TB, Dp)
    logits = jnp.dot(h, w2_ref[...], preferred_element_type=jnp.float32) + b2_ref[...]

    # Numerically stable softmax over the lane axis (padded lanes carry a -1e30 bias).
    m = jnp.max(logits, axis=-1, keepdims=True)
    e = jnp.exp(logits - m)
    s = jnp.sum(e, axis=-1, keepdims=True)
    w = e * pl.reciprocal(s, approx=True)  # EUP vrcp slot; keeps VALU free

    o_ref[...] = (w * x.astype(jnp.float32)).astype(o_ref.dtype)


def _round_up(n, m):
    return ((n + m - 1) // m) * m


def adaptive_feature_selection(x, w1, b1, w2, b2, *, block_b=512):
    """AdaptiveFeatureSelection forward.

    x  : (B, D)   input features
    w1 : (H, D)   fc1.weight (PyTorch (out, in) layout), H = D // 2
    b1 : (H,)     fc1.bias
    w2 : (D, H)   fc2.weight
    b2 : (D,)     fc2.bias
    """
    B, D = x.shape
    H = w1.shape[0]
    dt = x.dtype
    f32 = jnp.float32

    # Lane-dense padding of the feature dims (last/lane axis multiples of 128).
    Dp = _round_up(D, 128)
    Hp = _round_up(H, 128)

    # Cap the batch tile so x+out double-buffers stay well inside v7x's 64 MiB VMEM
    # even if D grows:  4 buffers * TB * Dp * 4B <= ~16 MiB.
    max_tb = max(256, ((16 * 1024 * 1024) // (4 * Dp * 4)) // 256 * 256)
    block_b = min(block_b, max_tb)

    grid_path = B > block_b
    Bp = _round_up(B, block_b) if grid_path else _round_up(B, 8)

    # Host-side padding / layout prep (weights pre-transposed to (in, out)).
    xp = jnp.zeros((Bp, Dp), dt).at[:B, :D].set(x)
    w1p = jnp.zeros((Dp, Hp), dt).at[:D, :H].set(w1.T.astype(dt))
    b1p = jnp.zeros((1, Hp), f32).at[0, :H].set(b1.astype(f32))
    w2p = jnp.zeros((Hp, Dp), dt).at[:H, :D].set(w2.T.astype(dt))
    b2p = jnp.full((1, Dp), _NEG_BIG, f32).at[0, :D].set(b2.astype(f32))

    out_shape = jax.ShapeDtypeStruct((Bp, Dp), dt)

    if not grid_path:
        # Single invocation, no grid, no pipeline machinery: everything VMEM-resident.
        out_p = pl.pallas_call(
            _afs_kernel,
            out_shape=out_shape,
            in_specs=[pl.BlockSpec(memory_space=pltpu.MemorySpace.VMEM)] * 5,
            out_specs=pl.BlockSpec(memory_space=pltpu.MemorySpace.VMEM),
        )(xp, w1p, b1p, w2p, b2p)
    else:
        # Tile over batch only; weights/biases stay resident via index_map (0, 0).
        out_p = pl.pallas_call(
            _afs_kernel,
            out_shape=out_shape,
            grid=(Bp // block_b,),
            in_specs=[
                pl.BlockSpec((block_b, Dp), lambda i: (i, 0)),
                pl.BlockSpec((Dp, Hp), lambda i: (0, 0)),
                pl.BlockSpec((1, Hp), lambda i: (0, 0)),
                pl.BlockSpec((Hp, Dp), lambda i: (0, 0)),
                pl.BlockSpec((1, Dp), lambda i: (0, 0)),
            ],
            out_specs=pl.BlockSpec((block_b, Dp), lambda i: (i, 0)),
            compiler_params=pltpu.CompilerParams(
                dimension_semantics=("parallel",)),  # shards batch across TCs on v7x
        )(xp, w1p, b1p, w2p, b2p)

    return out_p[:B, :D]


def _reference(x, w1, b1, w2, b2):
    h = jnp.maximum(x @ w1.T + b1, 0.0)
    logits = h @ w2.T + b2
    w = jax.nn.softmax(logits, axis=-1)
    return w * x


if __name__ == "__main__":
    B, D = 8, 32  # batch=8, input_dim=32 -> hidden=16
    H = D // 2

    key = jax.random.PRNGKey(0)
    kx, k1, k2, k3, k4 = jax.random.split(key, 5)

    x = jax.random.normal(kx, (B, D), dtype=jnp.float32)

    # PyTorch-style uniform(-1/sqrt(fan_in), +1/sqrt(fan_in)) init, PyTorch (out, in) layout.
    bound1 = 1.0 / jnp.sqrt(jnp.float32(D))
    bound2 = 1.0 / jnp.sqrt(jnp.float32(H))
    w1 = jax.random.uniform(k1, (H, D), jnp.float32, -bound1, bound1)  # fc1.weight
    b1 = jax.random.uniform(k2, (H,), jnp.float32, -bound1, bound1)    # fc1.bias
    w2 = jax.random.uniform(k3, (D, H), jnp.float32, -bound2, bound2)  # fc2.weight
    b2 = jax.random.uniform(k4, (D,), jnp.float32, -bound2, bound2)    # fc2.bias

    # Small case: gridless, fully VMEM-resident path.
    out = adaptive_feature_selection(x, w1, b1, w2, b2)
    out = jax.block_until_ready(out)
    ref = _reference(x, w1, b1, w2, b2)
    assert out.shape == (B, D)
    assert jnp.allclose(out, ref, atol=1e-3, rtol=1e-3), float(jnp.max(jnp.abs(out - ref)))

    # Also exercise the batch-tiled (grid) path with a tiny tile to keep shapes small.
    B2 = 64
    x2 = jax.random.normal(jax.random.PRNGKey(1), (B2, D), dtype=jnp.float32)
    out2 = adaptive_feature_selection(x2, w1, b1, w2, b2, block_b=16)
    out2 = jax.block_until_ready(out2)
    ref2 = _reference(x2, w1, b1, w2, b2)
    assert out2.shape == (B2, D)
    assert jnp.allclose(out2, ref2, atol=1e-3, rtol=1e-3), float(jnp.max(jnp.abs(out2 - ref2)))

    print("KERNEL_OK")
</pallas_src>

<mosaic_0001>
module attributes {stable_mosaic.version = 11 : i64} {
  func.func @_afs_kernel(%arg0: memref<8x128xf32, #tpu.memory_space<vmem>>, %arg1: memref<128x128xf32, #tpu.memory_space<vmem>>, %arg2: memref<1x128xf32, #tpu.memory_space<vmem>>, %arg3: memref<128x128xf32, #tpu.memory_space<vmem>>, %arg4: memref<1x128xf32, #tpu.memory_space<vmem>>, %arg5: memref<8x128xf32, #tpu.memory_space<vmem>>) attributes {dimension_semantics = [], scalar_prefetch = 0 : i64, scratch_operands = 0 : i64, tpu.core_type = #tpu.core_type<tc>} {
    %c0 = arith.constant 0 : index
    %c0_0 = arith.constant 0 : index
    %0 = vector.load %arg0[%c0, %c0_0] : memref<8x128xf32, #tpu.memory_space<vmem>>, vector<8x128xf32>
    %c0_1 = arith.constant 0 : index
    %c0_2 = arith.constant 0 : index
    %1 = vector.load %arg1[%c0_1, %c0_2] : memref<128x128xf32, #tpu.memory_space<vmem>>, vector<128x128xf32>
    %cst = arith.constant dense<0.000000e+00> : vector<8x128xf32>
    %2 = tpu.matmul %0, %1, %cst {dimension_numbers = #tpu.dot_dimension_numbers<[1], [0], [0], [1], [0, 0, 1, 1], [], []>} : vector<8x128xf32>, vector<128x128xf32>, vector<8x128xf32> -> vector<8x128xf32>
    %c0_3 = arith.constant 0 : index
    %c0_4 = arith.constant 0 : index
    %3 = vector.load %arg2[%c0_3, %c0_4] : memref<1x128xf32, #tpu.memory_space<vmem>>, vector<1x128xf32>
    %4 = vector.broadcast %3 : vector<1x128xf32> to vector<8x128xf32>
    %5 = arith.addf %2, %4 : vector<8x128xf32>
    %cst_5 = arith.constant 0.000000e+00 : f32
    %6 = vector.broadcast %cst_5 : f32 to vector<8x128xf32>
    %7 = arith.maximumf %5, %6 : vector<8x128xf32>
    %c0_6 = arith.constant 0 : index
    %c0_7 = arith.constant 0 : index
    %8 = vector.load %arg3[%c0_6, %c0_7] : memref<128x128xf32, #tpu.memory_space<vmem>>, vector<128x128xf32>
    %cst_8 = arith.constant dense<0.000000e+00> : vector<8x128xf32>
    %9 = tpu.matmul %7, %8, %cst_8 {dimension_numbers = #tpu.dot_dimension_numbers<[1], [0], [0], [1], [0, 0, 1, 1], [], []>} : vector<8x128xf32>, vector<128x128xf32>, vector<8x128xf32> -> vector<8x128xf32>
    %c0_9 = arith.constant 0 : index
    %c0_10 = arith.constant 0 : index
    %10 = vector.load %arg4[%c0_9, %c0_10] : memref<1x128xf32, #tpu.memory_space<vmem>>, vector<1x128xf32>
    %11 = vector.broadcast %10 : vector<1x128xf32> to vector<8x128xf32>
    %12 = arith.addf %9, %11 : vector<8x128xf32>
    %cst_11 = arith.constant dense<0xFF800000> : vector<8xf32>
    %13 = vector.multi_reduction <maximumf>, %12, %cst_11 [1] : vector<8x128xf32> to vector<8xf32>
    %14 = vector.shape_cast %13 : vector<8xf32> to vector<8x1xf32>
    %15 = vector.broadcast %14 : vector<8x1xf32> to vector<8x128xf32>
    %16 = arith.subf %12, %15 : vector<8x128xf32>
    %17 = math.exp %16 : vector<8x128xf32>
    %cst_12 = arith.constant dense<0.000000e+00> : vector<8xf32>
    %18 = vector.multi_reduction <add>, %17, %cst_12 [1] : vector<8x128xf32> to vector<8xf32>
    %19 = vector.shape_cast %18 : vector<8xf32> to vector<8x1xf32>
    %20 = tpu.reciprocal %19 {approx = true} : vector<8x1xf32> -> vector<8x1xf32>
    %21 = vector.broadcast %20 : vector<8x1xf32> to vector<8x128xf32>
    %22 = arith.mulf %17, %21 : vector<8x128xf32>
    %23 = arith.mulf %22, %0 : vector<8x128xf32>
    %c0_13 = arith.constant 0 : index
    %c0_14 = arith.constant 0 : index
    %24 = vector.load %arg5[%c0_13, %c0_14] : memref<8x128xf32, #tpu.memory_space<vmem>>, vector<8x128xf32>
    tpu.vector_store %arg5[%c0_13, %c0_14], %23 {strides = array<i32>} : memref<8x128xf32, #tpu.memory_space<vmem>>, vector<8x128xf32>,
    return
  }
}

</mosaic_0001>

<llo_original>
// kernel: tpu_custom_call.1
$region0: #{tpu_custom_call.1}
  #allocation0 [shape = 'u32[]', space=smem, size = 0x4, offset = 0x4, fixed_abs, tag = 'smem constant byte address 0x4 - core index']
  #allocation1 [shape = 'u32[72,128]{1,0:T(1,128)}', space=vmem, size = 0x9000, scoped, tag = 'internal scratch']
  %s0 = inlined_call_operand.hbm [shape: f32[8,128], index: 0, kind: input, shape index: {}]
  %s1 = inlined_call_operand.hbm [shape: f32[128,128], index: 1, kind: input, shape index: {}]
  %s2 = inlined_call_operand.vmem [shape: f32[1,128], index: 2, kind: input, shape index: {}]
  %s3 = inlined_call_operand.hbm [shape: f32[128,128], index: 3, kind: input, shape index: {}]
  %s4 = inlined_call_operand.vmem [shape: f32[1,128], index: 4, kind: input, shape index: {}]
  %s5 = inlined_call_operand.hbm [shape: f32[8,128], index: 5, kind: output, shape index: {}]
  %s6 = sld [smem:[#allocation0]]
  $region42: #{tpu_custom_call.1} parent=0
    _
  %s8 = ssub.s32 1, %s6
  %s9 = scalar_select 0, %s8, %s6
  $region1: #{tpu_custom_call.1} parent=0
    #allocation2 [shape = 'u8[4096]{0}', space=vmem, size = 0x1000, scoped, tag = 'input window, operand 0, single buffered']
    #allocation3 [shape = 's32[1]{0}', space=sflag, size = 0x4, scoped, tag = 'scoped memory for tpu_custom_call.1']
    #allocation4 [shape = 's32[1]{0}', space=sflag, size = 0x4, scoped, tag = 'scoped memory for tpu_custom_call.1']
    #allocation5 [shape = 'u8[65536]{0}', space=vmem, size = 0x10000, scoped, tag = 'input window, operand 1, single buffered']
    #allocation6 [shape = 's32[1]{0}', space=sflag, size = 0x4, scoped, tag = 'scoped memory for tpu_custom_call.1']
    #allocation7 [shape = 'u8[65536]{0}', space=vmem, size = 0x10000, scoped, tag = 'input window, operand 3, single buffered']
    #allocation8 [shape = 'u8[4096]{0}', space=vmem, size = 0x1000, scoped, tag = 'output window, operand 0, single buffered']
    %10 = vsyncpa [#allocation3], 0
    %11 = vsyncpa [#allocation6], 0
    %12 = vsyncpa [#allocation4], 0
    // Predicated region
    $region2: #{tpu_custom_call.1} parent=1 // pred_check
      _
    $region3: #{tpu_custom_call.1} parent=1 // pred_check_branch
      %14 = sbr.rel (0) target = $region5
    $region4: #{tpu_custom_call.1} parent=1 // pred_region
      %16 = vsyncadd [#allocation3], 0
      %s18 = sshll.u32 %s0, 4
      %s19 = int_to_ptr.hbm [resolvable:$true] %s18
      %s20 = sshll.u32 [#allocation2], 4
      %s21 = int_to_ptr.vmem [resolvable:$true] %s20
      %23 = dma.hbm_to_vmem [thread:$0]  %s19, 128, %s21, [#allocation3]
    $region5: #{tpu_custom_call.1} parent=1 // pred_fallthru
      _
    // Predicated region
    $region6: #{tpu_custom_call.1} parent=1 // pred_check
      _
    $region7: #{tpu_custom_call.1} parent=1 // pred_check_branch
      %25 = sbr.rel (0) target = $region9
    $region8: #{tpu_custom_call.1} parent=1 // pred_region
      %27 = vsyncadd [#allocation6], 0
      %s28 = sshll.u32 %s1, 4
      %s29 = int_to_ptr.hbm [resolvable:$true] %s28
      %s30 = sshll.u32 [#allocation5], 4
      %s31 = int_to_ptr.vmem [resolvable:$true] %s30
      %36 = dma.hbm_to_vmem [thread:$0]  %s29, 2048, %s31, [#allocation6], 128, 128, 8
    $region9: #{tpu_custom_call.1} parent=1 // pred_fallthru
      _
    // Predicated region
    $region10: #{tpu_custom_call.1} parent=1 // pred_check
      _
    $region11: #{tpu_custom_call.1} parent=1 // pred_check_branch
      %38 = sbr.rel (0) target = $region13
    $region12: #{tpu_custom_call.1} parent=1 // pred_region
      _
    $region13: #{tpu_custom_call.1} parent=1 // pred_fallthru
      _
    // Predicated region
    $region14: #{tpu_custom_call.1} parent=1 // pred_check
      _
    $region15: #{tpu_custom_call.1} parent=1 // pred_check_branch
      %40 = sbr.rel (0) target = $region17
    $region16: #{tpu_custom_call.1} parent=1 // pred_region
      %42 = vsyncadd [#allocation6], 0
      %s43 = sshll.u32 %s3, 4
      %s44 = int_to_ptr.hbm [resolvable:$true] %s43
      %s45 = sshll.u32 [#allocation7], 4
      %s46 = int_to_ptr.vmem [resolvable:$true] %s45
      %51 = dma.hbm_to_vmem [thread:$0]  %s44, 2048, %s46, [#allocation6], 128, 128, 8
    $region17: #{tpu_custom_call.1} parent=1 // pred_fallthru
      _
    // Predicated region
    $region18: #{tpu_custom_call.1} parent=1 // pred_check
      _
    $region19: #{tpu_custom_call.1} parent=1 // pred_check_branch
      %53 = sbr.rel (0) target = $region21
    $region20: #{tpu_custom_call.1} parent=1 // pred_region
      _
    $region21: #{tpu_custom_call.1} parent=1 // pred_fallthru
      _
    // Predicated region
    $region22: #{tpu_custom_call.1} parent=1 // pred_check
      _
    $region23: #{tpu_custom_call.1} parent=1 // pred_check_branch
      %55 = sbr.rel (0) target = $region25
    $region24: #{tpu_custom_call.1} parent=1 // pred_region
      %57 = dma.done [#allocation3], 128
    $region25: #{tpu_custom_call.1} parent=1 // pred_fallthru
      _
    // Predicated region
    $region26: #{tpu_custom_call.1} parent=1 // pred_check
      _
    $region27: #{tpu_custom_call.1} parent=1 // pred_check_branch
      %59 = sbr.rel (0) target = $region29
    $region28: #{tpu_custom_call.1} parent=1 // pred_region
      %61 = dma.done [#allocation6], 2048
    $region29: #{tpu_custom_call.1} parent=1 // pred_fallthru
      _
    // Predicated region
    $region30: #{tpu_custom_call.1} parent=1 // pred_check
      _
    $region31: #{tpu_custom_call.1} parent=1 // pred_check_branch
      %63 = sbr.rel (0) target = $region33
    $region32: #{tpu_custom_call.1} parent=1 // pred_region
      %65 = dma.done [#allocation6], 2048
    $region33: #{tpu_custom_call.1} parent=1 // pred_fallthru
      _
    %v66 = vld [vmem:[#allocation2] sm:$0xff]
    %v67 = vld [vmem:[#allocation5] sm:$0xff]
    %v68 = vld [vmem:[#allocation5 + $0x8] sm:$0xff]
    %v69 = vld [vmem:[#allocation5 + $0x10] sm:$0xff]
    %v70 = vld [vmem:[#allocation5 + $0x18] sm:$0xff]
    %v71 = vld [vmem:[#allocation5 + $0x20] sm:$0xff]
    %v72 = vld [vmem:[#allocation5 + $0x28] sm:$0xff]
    %v73 = vld [vmem:[#allocation5 + $0x30] sm:$0xff]
    %v74 = vld [vmem:[#allocation5 + $0x38] sm:$0xff]
    %v75 = vld [vmem:[#allocation5 + $0x40] sm:$0xff]
    %v76 = vld [vmem:[#allocation5 + $0x48] sm:$0xff]
    %v77 = vld [vmem:[#allocation5 + $0x50] sm:$0xff]
    %v78 = vld [vmem:[#allocation5 + $0x58] sm:$0xff]
    %v79 = vld [vmem:[#allocation5 + $0x60] sm:$0xff]
    %v80 = vld [vmem:[#allocation5 + $0x68] sm:$0xff]
    %v81 = vld [vmem:[#allocation5 + $0x70] sm:$0xff]
    %v82 = vld [vmem:[#allocation5 + $0x78] sm:$0xff]
    %v83 = vld [vmem:[%s2] sm:$0x1]
    %v85 = vperm.slane %v83, 0
    %87 = vmatpush.msra.mxu0 %v82
    %88 = vmatpush.msra.mxu0 %v81
    %89 = vmatpush.msra.mxu0 %v80
    %90 = vmatpush.msra.mxu0 %v79
    %91 = vmatpush.msra.mxu0 %v78
    %92 = vmatpush.msra.mxu0 %v77
    %93 = vmatpush.msra.mxu0 %v76
    %94 = vmatpush.msra.mxu0 %v75
    %95 = vmatpush.msra.mxu0 %v74
    %96 = vmatpush.msra.mxu0 %v73
    %97 = vmatpush.msra.mxu0 %v72
    %98 = vmatpush.msra.mxu0 %v71
    %99 = vmatpush.msra.mxu0 %v70
    %100 = vmatpush.msra.mxu0 %v69
    %101 = vmatpush.msra.mxu0 %v68
    %102 = vmatpush.msra.mxu0 %v67
    %103 = vmatmul.f32.gmra.mxu0 %v66
    %v104 = vpop.f32.mrf.mxu0
    %v105 = vadd.f32 %v85, %v104
    %106 = vdwg.mxu0
    %v107 = vmax.f32 %v105, 0.0
    %v108 = vld [vmem:[#allocation7] sm:$0xff]
    %v109 = vld [vmem:[#allocation7 + $0x8] sm:$0xff]
    %v110 = vld [vmem:[#allocation7 + $0x10] sm:$0xff]
    %v111 = vld [vmem:[#allocation7 + $0x18] sm:$0xff]
    %v112 = vld [vmem:[#allocation7 + $0x20] sm:$0xff]
    %v113 = vld [vmem:[#allocation7 + $0x28] sm:$0xff]
    %v114 = vld [vmem:[#allocation7 + $0x30] sm:$0xff]
    %v115 = vld [vmem:[#allocation7 + $0x38] sm:$0xff]
    %v116 = vld [vmem:[#allocation7 + $0x40] sm:$0xff]
    %v117 = vld [vmem:[#allocation7 + $0x48] sm:$0xff]
    %v118 = vld [vmem:[#allocation7 + $0x50] sm:$0xff]
    %v119 = vld [vmem:[#allocation7 + $0x58] sm:$0xff]
    %v120 = vld [vmem:[#allocation7 + $0x60] sm:$0xff]
    %v121 = vld [vmem:[#allocation7 + $0x68] sm:$0xff]
    %v122 = vld [vmem:[#allocation7 + $0x70] sm:$0xff]
    %v123 = vld [vmem:[#allocation7 + $0x78] sm:$0xff]
    %v124 = vld [vmem:[%s4] sm:$0x1]
    %v126 = vperm.slane %v124, 0
    %128 = vmatpush.msra.mxu0 %v123
    %129 = vmatpush.msra.mxu0 %v122
    %130 = vmatpush.msra.mxu0 %v121
    %131 = vmatpush.msra.mxu0 %v120
    %132 = vmatpush.msra.mxu0 %v119
    %133 = vmatpush.msra.mxu0 %v118
    %134 = vmatpush.msra.mxu0 %v117
    %135 = vmatpush.msra.mxu0 %v116
    %136 = vmatpush.msra.mxu0 %v115
    %137 = vmatpush.msra.mxu0 %v114
    %138 = vmatpush.msra.mxu0 %v113
    %139 = vmatpush.msra.mxu0 %v112
    %140 = vmatpush.msra.mxu0 %v111
    %141 = vmatpush.msra.mxu0 %v110
    %142 = vmatpush.msra.mxu0 %v109
    %143 = vmatpush.msra.mxu0 %v108
    %144 = vmatmul.f32.gmra.mxu0 %v107
    %v145 = vpop.f32.mrf.mxu0
    %v146 = vadd.f32 %v126, %v145
    %147 = vdwg.mxu0
    %148 = vmax.xlane.f32.xlu0 %v146
    %v149 = vpop.xlane.xlu0 %148
    %v150 = vsub.f32 %v146, %v149
    %v151 = vmul.f32 %v150, 1.442695
    %v152 = vpow.pop %v151
    %153 = vadd.xlane.f32.xlu0 %v152
    %v154 = vpop.xlane.xlu0 %153
    %v155 = vrcp.pop %v154
    %v156 = vmul.f32 %v152, %v155
    %v157 = vmul.f32 %v156, %v66
    %158 = vst [vmem:[#allocation8] sm:$0xff] %v157
    // Predicated region
    $region34: #{tpu_custom_call.1} parent=1 // pred_check
      _
    $region35: #{tpu_custom_call.1} parent=1 // pred_check_branch
      %160 = sbr.rel (0) target = $region37
    $region36: #{tpu_custom_call.1} parent=1 // pred_region
      %162 = vsyncadd [#allocation4], 0
      %s164 = sshll.u32 [#allocation8], 4
      %s165 = int_to_ptr.vmem [resolvable:$true] %s164
      %s166 = sshll.u32 %s5, 4
      %s167 = int_to_ptr.hbm [resolvable:$true] %s166
      %169 = dma.vmem_to_hbm [thread:$0]  %s165, 128, %s167, [#allocation4]
    $region37: #{tpu_custom_call.1} parent=1 // pred_fallthru
      _
    // Predicated region
    $region38: #{tpu_custom_call.1} parent=1 // pred_check
      _
    $region39: #{tpu_custom_call.1} parent=1 // pred_check_branch
      %171 = sbr.rel (0) target = $region41
    $region40: #{tpu_custom_call.1} parent=1 // pred_region
      %173 = dma.done [#allocation4], 128
    $region41: #{tpu_custom_call.1} parent=1 // pred_fallthru
      _
    %174 = vsyncpa [#allocation3], 1
    %175 = vsyncpa [#allocation6], 1
    %176 = vsyncpa [#allocation4], 1

</llo_original>
